<compile_context>
chip_gen: v7x
topology: tpu7x:2x2x1
jax: 0.10.0
libtpu: 0.0.40
codegen_flags: <defaults>
</compile_context>

<pallas_src>
import functools
import math

import jax
import jax.numpy as jnp
from jax.experimental import pallas as pl
from jax.experimental.pallas import tpu as pltpu


def _round_up(a, b):
    return (a + b - 1) // b * b


# ------------------------------ Pallas kernel ------------------------------ #

def _primary_caps_kernel(p_ref, w_ref, b_ref, o_ref, acc_ref, *, vec_dim):
    """Fused conv-as-matmul + bias + squash for one (TM x Npad) output tile.

    p_ref   : [TM, TK]    bf16  im2col patch rows (row = b*Ho*Wo + h*Wo + w)
    w_ref   : [TK, Npad]  bf16  flattened capsule filters (col = cap*out_ch+oc)
    b_ref   : [1, Npad]   f32   biases (zero in padded columns)
    o_ref   : [TM, Npad]  f32   squash(conv) in the same lane-dense layout
    acc_ref : [TM, Npad]  f32   VMEM accumulator across the K grid axis
    """
    kk = pl.program_id(1)

    @pl.when(kk == 0)
    def _():
        acc_ref[...] = jnp.zeros_like(acc_ref)

    # MXU: bf16 x bf16 -> f32 accumulate into VMEM scratch.
    acc_ref[...] += jnp.dot(p_ref[...], w_ref[...],
                            preferred_element_type=jnp.float32)

    @pl.when(kk == pl.num_programs(1) - 1)
    def _():
        conv = acc_ref[...] + b_ref[...]                       # [TM, Npad] f32
        tm, npad = conv.shape
        # Capsule vectors are vec_dim *consecutive spatial rows* of one column
        # (valid because vec_dim | Ho*Wo and vec_dim | TM).
        g = conv.reshape(tm // vec_dim, vec_dim, npad)         # [G, vec, Npad]
        n2 = jnp.sum(g * g, axis=1, keepdims=True)             # [G, 1, Npad]
        # squash scale = n2 / ((1+n2)*sqrt(n2)) == sqrt(n2) / (1+n2)
        scale = jnp.sqrt(n2 + 1e-9) * pl.reciprocal(1.0 + n2, approx=True)
        # TODO(synk): for TM >= 256 chunk this epilogue over row groups to keep
        # the f32 intermediates out of the spill zone.
        o_ref[...] = (g * scale).reshape(tm, npad).astype(o_ref.dtype)


# ------------------------------- wrapper ----------------------------------- #

def primary_caps_forward(x, W, b, *, kernel_size, stride, num_routes,
                         tm=256, tk=1024, mxu_dtype=jnp.bfloat16):
    """
    x: [B, C, H, W]  (NCHW, matches PyTorch)
    W: [num_caps, out_ch, C, k, k]
    b: [num_caps, out_ch]
    returns: [B, num_routes, vec_dim] (squashed), matching the PyTorch module.
    """
    B, C, H, Wd = x.shape
    num_caps, out_ch = b.shape
    k = kernel_size
    Ho = (H - k) // stride + 1
    Wo = (Wd - k) // stride + 1
    HW = Ho * Wo
    K = C * k * k
    N = num_caps * out_ch
    M = B * HW

    total = N * HW
    assert total % num_routes == 0
    vec_dim = total // num_routes
    # The fused in-layout squash needs capsule vectors to be groups of
    # consecutive spatial positions of one (cap, oc) map (true for the plain
    # torch .view() whenever vec_dim | Ho*Wo):
    assert HW % vec_dim == 0, "fused kernel requires vec_dim | Ho*Wo"
    # TODO(synk): add a fallback lane-dense squash pass over a
    # [vec_dim, B*num_routes] slab for configs where vec_dim does not divide
    # Ho*Wo (e.g. the canonical 32 x 6 x 6 PrimaryCaps spatial shape).
    n_groups = HW // vec_dim

    # ---- patch extraction (im2col) as one fused XLA conv -------------------
    # TODO(synk): at real CapsNet scale (C=256) this still materializes the
    # inflated patch matrix in HBM; move patch formation in-kernel (x under
    # memory_space=pl.ANY + manual make_async_copy) to remove the blow-up.
    patches = jax.lax.conv_general_dilated_patches(
        x, (k, k), (stride, stride), "VALID")                # [B, K, Ho, Wo]
    patches = jnp.moveaxis(patches, 1, 3).reshape(M, K)      # [M, K]
    # Flatten the filters through the SAME extractor -> K ordering matches the
    # patches by construction (no reliance on a documented channel order).
    w_flat = jax.lax.conv_general_dilated_patches(
        W.reshape(N, C, k, k), (k, k), (1, 1), "VALID").reshape(N, K)

    # ---- tile sizes / padding ----------------------------------------------
    base_m = (16 * vec_dim) // math.gcd(16, vec_dim)   # multiple of vec_dim & 16
    TM = _round_up(min(tm, _round_up(M, base_m)), base_m)
    Mpad = _round_up(M, TM)
    TK = _round_up(min(tk, _round_up(K, 128)), 128)
    Kpad = _round_up(K, TK)
    Npad = _round_up(N, 128)

    p_mat = jnp.pad(patches.astype(mxu_dtype), ((0, Mpad - M), (0, Kpad - K)))
    w_mat = jnp.pad(w_flat.T.astype(mxu_dtype), ((0, Kpad - K), (0, Npad - N)))
    b_mat = jnp.pad(b.reshape(1, N).astype(jnp.float32),
                    ((0, 0), (0, Npad - N)))

    kernel = functools.partial(_primary_caps_kernel, vec_dim=vec_dim)
    out = pl.pallas_call(
        kernel,
        out_shape=jax.ShapeDtypeStruct((Mpad, Npad), jnp.float32),
        grid_spec=pltpu.PrefetchScalarGridSpec(
            num_scalar_prefetch=0,
            grid=(Mpad // TM, Kpad // TK),
            in_specs=[
                pl.BlockSpec((TM, TK), lambda m, kk: (m, kk)),     # patches
                pl.BlockSpec((TK, Npad), lambda m, kk: (kk, 0)),   # weights
                pl.BlockSpec((1, Npad), lambda m, kk: (0, 0)),     # bias
            ],
            out_specs=pl.BlockSpec((TM, Npad), lambda m, kk: (m, 0)),
            scratch_shapes=[pltpu.VMEM((TM, Npad), jnp.float32)],
        ),
        compiler_params=pltpu.CompilerParams(
            dimension_semantics=("parallel", "arbitrary")),
    )(p_mat, w_mat, b_mat)                                         # [Mpad, Npad]

    # Pure layout plumbing reproducing torch.stack(dim=1) + view exactly:
    # kernel index (b, j, d, n=cap*out_ch+oc)  ->  torch flat order (n, j, d).
    u = out[:M, :N].reshape(B, n_groups, vec_dim, N)
    u = u.transpose(0, 3, 1, 2)                    # [B, N, n_groups, vec_dim]
    return u.reshape(B, num_routes, vec_dim)


# ------------------------------ reference ---------------------------------- #

def primary_caps_reference(x, W, b, *, kernel_size, stride, num_routes):
    num_caps = W.shape[0]
    outs = []
    for i in range(num_caps):
        o = jax.lax.conv_general_dilated(
            x, W[i], (stride, stride), "VALID",
            dimension_numbers=("NCHW", "OIHW", "NCHW"),
        )
        o = o + b[i][None, :, None, None]
        outs.append(o)
    u = jnp.stack(outs, axis=1)                    # [B, caps, oc, Ho, Wo]
    u = u.reshape(x.shape[0], num_routes, -1)
    sq = jnp.sum(u * u, axis=-1, keepdims=True)
    return sq * u / ((1.0 + sq) * jnp.sqrt(sq))


# --------------------------------- main ------------------------------------ #

if __name__ == "__main__":
    # Small shapes consistent with the module's forward:
    B, C, H = 2, 4, 16
    num_caps, out_ch, kernel_size, stride = 8, 8, 9, 2
    Ho = (H - kernel_size) // stride + 1           # 4
    num_routes = out_ch * Ho * Ho                  # 128 (= out_ch * Ho * Wo)
    vec_dim = num_caps * out_ch * Ho * Ho // num_routes   # 8

    key = jax.random.PRNGKey(0)
    kx, kw, kb = jax.random.split(key, 3)
    x = jax.random.normal(kx, (B, C, H, H), dtype=jnp.float32)
    W = jax.random.normal(kw, (num_caps, out_ch, C, kernel_size, kernel_size),
                          dtype=jnp.float32) * 0.05
    b = jax.random.normal(kb, (num_caps, out_ch), dtype=jnp.float32) * 0.05

    # tm=16 / tk=128 exercises a multi-step (M=2, K=3) grid at this tiny size;
    # at real scale leave the defaults (tm=256, tk=1024).
    out = primary_caps_forward(x, W, b, kernel_size=kernel_size, stride=stride,
                               num_routes=num_routes, tm=16, tk=128)
    out = jax.block_until_ready(out)

    # Reference: f32 math on bf16-rounded inputs (the kernel feeds the MXU bf16
    # with f32 accumulation); remaining tolerance covers accumulation order,
    # the squash epsilon and the approximate reciprocal.
    x_r = x.astype(jnp.bfloat16).astype(jnp.float32)
    W_r = W.astype(jnp.bfloat16).astype(jnp.float32)
    ref = primary_caps_reference(x_r, W_r, b, kernel_size=kernel_size,
                                 stride=stride, num_routes=num_routes)

    assert out.shape == (B, num_routes, vec_dim), out.shape
    err = float(jnp.max(jnp.abs(out - ref)))
    assert jnp.allclose(out, ref, rtol=2e-2, atol=2e-3), \
        f"mismatch, max abs err={err}"

    print("KERNEL_OK")
</pallas_src>

<mosaic_0001>
module attributes {stable_mosaic.version = 11 : i64} {
  func.func @_primary_caps_kernel(%arg0: i32, %arg1: i32, %arg2: memref<16x128xbf16, #tpu.memory_space<vmem>>, %arg3: memref<128x128xbf16, #tpu.memory_space<vmem>>, %arg4: memref<1x128xf32, #tpu.memory_space<vmem>>, %arg5: memref<16x128xf32, #tpu.memory_space<vmem>>, %arg6: memref<16x128xf32, #tpu.memory_space<vmem>>) attributes {dimension_semantics = [#tpu.dimension_semantics<parallel>, #tpu.dimension_semantics<arbitrary>], iteration_bounds = array<i64: 2, 3>, scalar_prefetch = 0 : i64, scratch_operands = 1 : i64, tpu.core_type = #tpu.core_type<tc>, window_params = [{transform_indices = @transform_0, window_bounds = array<i64: 16, 128>}, {transform_indices = @transform_1, window_bounds = array<i64: 128, 128>}, {pipeline_mode = #tpu.pipeline_mode<synchronous>, transform_indices = @transform_2, window_bounds = array<i64: 1, 128>}, {transform_indices = @transform_3, window_bounds = array<i64: 16, 128>}]} {
    %c0_i32 = arith.constant 0 : i32
    %0 = arith.cmpi eq, %arg1, %c0_i32 : i32
    %1 = arith.extui %0 : i1 to i32
    %c0_i32_0 = arith.constant 0 : i32
    %2 = arith.cmpi ne, %1, %c0_i32_0 : i32
    scf.if %2 {
      %cst_9 = arith.constant 0.000000e+00 : f32
      %12 = vector.broadcast %cst_9 : f32 to vector<16x128xf32>
      %c0_10 = arith.constant 0 : index
      %c0_11 = arith.constant 0 : index
      %13 = vector.load %arg6[%c0_10, %c0_11] : memref<16x128xf32, #tpu.memory_space<vmem>>, vector<16x128xf32>
      tpu.vector_store %arg6[%c0_10, %c0_11], %12 {strides = array<i32>} : memref<16x128xf32, #tpu.memory_space<vmem>>, vector<16x128xf32>,
    } else {
    }
    %c0 = arith.constant 0 : index
    %c0_1 = arith.constant 0 : index
    %3 = vector.load %arg6[%c0, %c0_1] : memref<16x128xf32, #tpu.memory_space<vmem>>, vector<16x128xf32>
    %c0_2 = arith.constant 0 : index
    %c0_3 = arith.constant 0 : index
    %4 = vector.load %arg2[%c0_2, %c0_3] : memref<16x128xbf16, #tpu.memory_space<vmem>>, vector<16x128xbf16>
    %c0_4 = arith.constant 0 : index
    %c0_5 = arith.constant 0 : index
    %5 = vector.load %arg3[%c0_4, %c0_5] : memref<128x128xbf16, #tpu.memory_space<vmem>>, vector<128x128xbf16>
    %cst = arith.constant dense<0.000000e+00> : vector<16x128xf32>
    %6 = tpu.matmul %4, %5, %cst {dimension_numbers = #tpu.dot_dimension_numbers<[1], [0], [0], [1], [0, 0, 1, 1], [], []>} : vector<16x128xbf16>, vector<128x128xbf16>, vector<16x128xf32> -> vector<16x128xf32>
    %7 = arith.addf %3, %6 : vector<16x128xf32>
    %c0_6 = arith.constant 0 : index
    %c0_7 = arith.constant 0 : index
    %8 = vector.load %arg6[%c0_6, %c0_7] : memref<16x128xf32, #tpu.memory_space<vmem>>, vector<16x128xf32>
    tpu.vector_store %arg6[%c0_6, %c0_7], %7 {strides = array<i32>} : memref<16x128xf32, #tpu.memory_space<vmem>>, vector<16x128xf32>,
    %c2_i32 = arith.constant 2 : i32
    %9 = arith.cmpi eq, %arg1, %c2_i32 : i32
    %10 = arith.extui %9 : i1 to i32
    %c0_i32_8 = arith.constant 0 : i32
    %11 = arith.cmpi ne, %10, %c0_i32_8 : i32
    scf.if %11 {
      %c0_9 = arith.constant 0 : index
      %c0_10 = arith.constant 0 : index
      %12 = vector.load %arg6[%c0_9, %c0_10] : memref<16x128xf32, #tpu.memory_space<vmem>>, vector<16x128xf32>
      %c0_11 = arith.constant 0 : index
      %c0_12 = arith.constant 0 : index
      %13 = vector.load %arg4[%c0_11, %c0_12] : memref<1x128xf32, #tpu.memory_space<vmem>>, vector<1x128xf32>
      %14 = vector.broadcast %13 : vector<1x128xf32> to vector<16x128xf32>
      %15 = arith.addf %12, %14 : vector<16x128xf32>
      %16 = vector.shape_cast %15 : vector<16x128xf32> to vector<2x8x128xf32>
      %17 = arith.mulf %16, %16 : vector<2x8x128xf32>
      %cst_13 = arith.constant dense<0.000000e+00> : vector<2x128xf32>
      %18 = vector.multi_reduction <add>, %17, %cst_13 [1] : vector<2x8x128xf32> to vector<2x128xf32>
      %19 = vector.shape_cast %18 : vector<2x128xf32> to vector<2x1x128xf32>
      %cst_14 = arith.constant 9.99999971E-10 : f32
      %20 = vector.broadcast %cst_14 : f32 to vector<2x1x128xf32>
      %21 = arith.addf %19, %20 : vector<2x1x128xf32>
      %22 = math.sqrt %21 : vector<2x1x128xf32>
      %cst_15 = arith.constant 1.000000e+00 : f32
      %23 = vector.broadcast %cst_15 : f32 to vector<2x1x128xf32>
      %24 = arith.addf %23, %19 : vector<2x1x128xf32>
      %25 = tpu.reciprocal %24 {approx = true} : vector<2x1x128xf32> -> vector<2x1x128xf32>
      %26 = arith.mulf %22, %25 : vector<2x1x128xf32>
      %27 = vector.broadcast %26 : vector<2x1x128xf32> to vector<2x8x128xf32>
      %28 = arith.mulf %16, %27 : vector<2x8x128xf32>
      %29 = vector.shape_cast %28 : vector<2x8x128xf32> to vector<16x128xf32>
      %c0_16 = arith.constant 0 : index
      %c0_17 = arith.constant 0 : index
      %30 = vector.load %arg5[%c0_16, %c0_17] : memref<16x128xf32, #tpu.memory_space<vmem>>, vector<16x128xf32>
      tpu.vector_store %arg5[%c0_16, %c0_17], %29 {strides = array<i32>} : memref<16x128xf32, #tpu.memory_space<vmem>>, vector<16x128xf32>,
    } else {
    }
    return
  }
  func.func @transform_0(%arg0: i32, %arg1: i32) -> (i32, i32) {
    %c0_i32 = arith.constant 0 : i32
    return %arg0, %arg1 : i32, i32
  }
  func.func @transform_1(%arg0: i32, %arg1: i32) -> (i32, i32) {
    %c0_i32 = arith.constant 0 : i32
    %c0_i32_0 = arith.constant 0 : i32
    return %arg1, %c0_i32 : i32, i32
  }
  func.func @transform_2(%arg0: i32, %arg1: i32) -> (i32, i32) {
    %c0_i32 = arith.constant 0 : i32
    %c0_i32_0 = arith.constant 0 : i32
    %c0_i32_1 = arith.constant 0 : i32
    return %c0_i32, %c0_i32_0 : i32, i32
  }
  func.func @transform_3(%arg0: i32, %arg1: i32) -> (i32, i32) {
    %c0_i32 = arith.constant 0 : i32
    %c0_i32_0 = arith.constant 0 : i32
    return %arg0, %c0_i32 : i32, i32
  }
}

</mosaic_0001>

<llo_original>
// kernel: tpu_custom_call.1
$region0: #{tpu_custom_call.1}
  #allocation0 [shape = 'u32[]', space=smem, size = 0x4, offset = 0x4, fixed_abs, tag = 'smem constant byte address 0x4 - core index']
  #allocation1 [shape = 'u32[144,128]{1,0:T(1,128)}', space=vmem, size = 0x12000, scoped, tag = 'internal scratch']
  #allocation2 [shape = 'f32[16,128]{1,0:T(8,128)}', space=vmem, size = 0x2000, scoped, tag = 'scratch operand']
  %s0 = inlined_call_operand.hbm [shape: bf16[32,384], index: 0, kind: input, shape index: {}]
  %s1 = inlined_call_operand.hbm [shape: bf16[384,128], index: 1, kind: input, shape index: {}]
  %s2 = inlined_call_operand.vmem [shape: f32[1,128], index: 2, kind: input, shape index: {}]
  %s3 = inlined_call_operand.hbm [shape: f32[32,128], index: 3, kind: output, shape index: {}]
  %s4 = sld [smem:[#allocation0]]
  $region61: #{tpu_custom_call.1} parent=0
    _
  %s6 = ssub.s32 1, %s4
  %s7 = scalar_select 0, %s6, %s4
  $region1: #{tpu_custom_call.1} parent=0
    #allocation3 [shape = 'u8[8192]{0}', space=vmem, size = 0x2000, scoped, tag = 'input window, operand 0']
    #allocation4 [shape = 's32[2]{0}', space=sflag, size = 0x8, scoped, tag = 'scoped memory for tpu_custom_call.1']
    #allocation5 [shape = 's32[2]{0}', space=sflag, size = 0x8, scoped, tag = 'scoped memory for tpu_custom_call.1']
    #allocation6 [shape = 'u8[65536]{0}', space=vmem, size = 0x10000, scoped, tag = 'input window, operand 1']
    #allocation7 [shape = 's32[2]{0}', space=sflag, size = 0x8, scoped, tag = 'scoped memory for tpu_custom_call.1']
    #allocation8 [shape = 'u8[16384]{0}', space=vmem, size = 0x4000, scoped, tag = 'output window, operand 0']
    %8 = vsyncpa [#allocation4], 0
    %s9 = scalar_lea.sflag [#allocation4], 1
    %10 = vsyncpa %s9, 0
    %11 = vsyncpa [#allocation7], 0
    %s12 = scalar_lea.sflag [#allocation7], 1
    %13 = vsyncpa %s12, 0
    %14 = vsyncpa [#allocation5], 0
    %s15 = scalar_lea.sflag [#allocation5], 1
    %16 = vsyncpa %s15, 0
    loop: start=0, step=1, limit=8
    $region2: #{tpu_custom_call.1} parent=1 // loop_pre_header
      _
    $region3: #{tpu_custom_call.1} parent=1 // loop_header
      %s18 = sphi 0, %s22
      %p19 = scmp.ge.s32.totalorder %s18, 8
      %s25 = sphi 0, %s37
      %s26 = sphi 0, %s33
      %s27 = sphi 0, %s25
      %s28 = sphi 0, %s26
      %s29 = sphi 0, %s27
      %s30 = sphi 0, %s28
      %s42 = sphi 0, %s44
      %s45 = sphi 0, %s42
      %s46 = sphi 0, %s45
      %s62 = sphi 0, %s46
      %s68 = sphi 0, %s70
      %s71 = sphi 0, %s68
      %s72 = sphi 0, %s71
      %s88 = sphi 0, %s72
      %s92 = sphi 0, %s92
      %s94 = sphi 0, %s92
      %s95 = sphi 0, %s94
      %s109 = sphi 0, %s95
      %s115 = sphi 0, %s117
      %s118 = sphi 0, %s115
      %s119 = sphi 0, %s118
      %s135 = sphi 0, %s119
    $region4: #{tpu_custom_call.1} parent=1 // loop_header_branch
      %21 = sbr.rel (%p19) target = $region8
    $region5: #{tpu_custom_call.1} parent=1 // loop_body
      %s23 = ssub.s32 %s18, 1
      %s24 = ssub.s32 %s18, 2
      %s31 = sadd.s32 1, %s26
      %p32 = scmp.ge.s32.totalorder %s31, 3
      %s33 = scalar_select %p32, 0, %s31
      %s34 = sadd.s32 1, %s25
      %s35 = scalar_select %p32, %s34, %s25
      %p36 = scmp.ge.s32.totalorder %s35, 2
      %s37 = scalar_select %p36, 0, %s35
      %s38 = ssub.s32 %s25, %s37
      %s39 = ssub.s32 %s26, %s33
      %s40 = sor.u32 %s38, %s39
      %p41 = scmp.eq.s32.totalorder %s40, 0
      %s43 = sadd.s32 %s42, 1
      %s44 = scalar_select %p41, %s42, %s43
      %p47 = pneg %p41
      %p48 = scmp.eq.s32.totalorder %s18, 5
      %p49 = por %p47, %p48
      %p50 = scmp.ne.s32.totalorder %s42, %s45
      %p51 = scmp.eq.s32.totalorder %s18, 0
      %p52 = por %p50, %p51
      %p53 = scmp.ne.s32.totalorder %s42, %s45
      %p54 = scmp.eq.s32.totalorder %s23, 5
      %p55 = por %p53, %p54
      %p56 = scmp.ne.s32.totalorder %s45, %s46
      %p57 = scmp.eq.s32.totalorder %s23, 0
      %p58 = por %p56, %p57
      %p59 = scmp.ne.s32.totalorder %s45, %s46
      %p60 = scmp.eq.s32.totalorder %s24, 5
      %p61 = por %p59, %p60
      %p63 = scmp.ne.s32.totalorder %s46, %s62
      %p64 = scmp.eq.s32.totalorder %s24, 0
      %p65 = por %p63, %p64
      %s66 = ssub.s32 %s26, %s33
      %p67 = scmp.eq.s32.totalorder %s66, 0
      %s69 = sadd.s32 %s68, 1
      %s70 = scalar_select %p67, %s68, %s69
      %p73 = pneg %p67
      %p74 = scmp.eq.s32.totalorder %s18, 5
      %p75 = por %p73, %p74
      %p76 = scmp.ne.s32.totalorder %s68, %s71
      %p77 = scmp.eq.s32.totalorder %s18, 0
      %p78 = por %p76, %p77
      %p79 = scmp.ne.s32.totalorder %s68, %s71
      %p80 = scmp.eq.s32.totalorder %s23, 5
      %p81 = por %p79, %p80
      %p82 = scmp.ne.s32.totalorder %s71, %s72
      %p83 = scmp.eq.s32.totalorder %s23, 0
      %p84 = por %p82, %p83
      %p85 = scmp.ne.s32.totalorder %s71, %s72
      %p86 = scmp.eq.s32.totalorder %s24, 5
      %p87 = por %p85, %p86
      %p89 = scmp.ne.s32.totalorder %s72, %s88
      %p90 = scmp.eq.s32.totalorder %s24, 0
      %p91 = por %p89, %p90
      %s93 = sadd.s32 %s92, 1
      %p96 = scmp.eq.s32.totalorder %s18, 5
      %p97 = scmp.ne.s32.totalorder %s92, %s94
      %p98 = scmp.eq.s32.totalorder %s18, 0
      %p99 = por %p97, %p98
      %p100 = scmp.ne.s32.totalorder %s92, %s94
      %p101 = scmp.eq.s32.totalorder %s23, 5
      %p102 = por %p100, %p101
      %p103 = scmp.ne.s32.totalorder %s94, %s95
      %p104 = scmp.eq.s32.totalorder %s23, 0
      %p105 = por %p103, %p104
      %p106 = scmp.ne.s32.totalorder %s94, %s95
      %p107 = scmp.eq.s32.totalorder %s24, 5
      %p108 = por %p106, %p107
      %p110 = scmp.ne.s32.totalorder %s95, %s109
      %p111 = scmp.eq.s32.totalorder %s24, 0
      %p112 = por %p110, %p111
      %s113 = ssub.s32 %s25, %s37
      %p114 = scmp.eq.s32.totalorder %s113, 0
      %s116 = sadd.s32 %s115, 1
      %s117 = scalar_select %p114, %s115, %s116
      %p120 = pneg %p114
      %p121 = scmp.eq.s32.totalorder %s18, 5
      %p122 = por %p120, %p121
      %p123 = scmp.ne.s32.totalorder %s115, %s118
      %p124 = scmp.eq.s32.totalorder %s18, 0
      %p125 = por %p123, %p124
      %p126 = scmp.ne.s32.totalorder %s115, %s118
      %p127 = scmp.eq.s32.totalorder %s23, 5
      %p128 = por %p126, %p127
      %p129 = scmp.ne.s32.totalorder %s118, %s119
      %p130 = scmp.eq.s32.totalorder %s23, 0
      %p131 = por %p129, %p130
      %p132 = scmp.ne.s32.totalorder %s118, %s119
      %p133 = scmp.eq.s32.totalorder %s24, 5
      %p134 = por %p132, %p133
      %p136 = scmp.ne.s32.totalorder %s119, %s135
      %p137 = scmp.eq.s32.totalorder %s24, 0
      %p138 = por %p136, %p137
      %p139 = scmp.le.s32.totalorder 1, %s18
      %p140 = scmp.lt.s32.totalorder %s18, 7
      %p141 = pnand %p139, %p140
      %p142 = pneg %p141
      // Predicated region
      $region9: #{tpu_custom_call.1} parent=5 // pred_check
        _
      $region10: #{tpu_custom_call.1} parent=5 // pred_check_branch
        %144 = sbr.rel (%p141) target = $region12
      $region11: #{tpu_custom_call.1} parent=5 // pred_region
        %s145 = ssub.s32 %s18, 1
        // Predicated region
        $region13: #{tpu_custom_call.1} parent=11 // pred_check
          %p146 = pneg %p105
        $region14: #{tpu_custom_call.1} parent=11 // pred_check_branch
          %148 = sbr.rel (%p146) target = $region16
        $region15: #{tpu_custom_call.1} parent=11 // pred_region
          _
        $region16: #{tpu_custom_call.1} parent=11 // pred_fallthru
          _
      $region12: #{tpu_custom_call.1} parent=5 // pred_fallthru
        _
      %p149 = scmp.lt.s32.totalorder %s18, 6
      // Predicated region
      $region17: #{tpu_custom_call.1} parent=5 // pred_check
        %p150 = pneg %p149
      $region18: #{tpu_custom_call.1} parent=5 // pred_check_branch
        %152 = sbr.rel (%p150) target = $region20
      $region19: #{tpu_custom_call.1} parent=5 // pred_region
        // Predicated region
        $region21: #{tpu_custom_call.1} parent=19 // pred_check
          %p153 = pneg %p52
        $region22: #{tpu_custom_call.1} parent=19 // pred_check_branch
          %155 = sbr.rel (%p153) target = $region24
        $region23: #{tpu_custom_call.1} parent=19 // pred_region
          %s156 = sand.u32 %s42, 1
          %s157 = scalar_lea.sflag [#allocation4], %s156
          %s158 = sand.u32 %s42, 1
          %s159 = smul.addr %s158, 8
          %s160 = scalar_lea.vmem [#allocation3], %s159
          %s161 = smul.u32 2, %s25
          %s163 = ssub.s32 128, 128
          %164 = vsyncadd %s157, %s163
          %s165 = smul.addr %s161, 3
          %s166 = sadd.s32 %s26, %s165
          %s167 = smul.addr %s166, 64
          %s168 = scalar_lea.hbm %s0, %s167
          %s169 = sshll.u32 %s160, 4
          %s170 = int_to_ptr.vmem [resolvable:$true] %s169
          %175 = dma.hbm_to_vmem [thread:$0]  %s168, 128, %s170, %s157, 192, 64, 4
        $region24: #{tpu_custom_call.1} parent=19 // pred_fallthru
          _
        // Predicated region
        $region25: #{tpu_custom_call.1} parent=19 // pred_check
          %p176 = pneg %p78
        $region26: #{tpu_custom_call.1} parent=19 // pred_check_branch
          %178 = sbr.rel (%p176) target = $region28
        $region27: #{tpu_custom_call.1} parent=19 // pred_region
          %s179 = sand.u32 %s68, 1
          %s180 = scalar_lea.sflag [#allocation7], %s179
          %s181 = sand.u32 %s68, 1
          %s182 = smul.addr %s181, 64
          %s183 = scalar_lea.vmem [#allocation6], %s182
          %s184 = smul.u32 16, %s26
          %s186 = ssub.s32 1024, 1024
          %187 = vsyncadd %s180, %s186
          %s188 = smul.addr %s184, 64
          %s189 = scalar_lea.hbm %s1, %s188
          %s190 = sshll.u32 %s183, 4
          %s191 = int_to_ptr.vmem [resolvable:$true] %s190
          %196 = dma.hbm_to_vmem [thread:$0]  %s189, 1024, %s191, %s180, 64, 64, 4
        $region28: #{tpu_custom_call.1} parent=19 // pred_fallthru
          _
      $region20: #{tpu_custom_call.1} parent=5 // pred_fallthru
        _
      %p197 = scmp.le.s32.totalorder 1, %s18
      %p198 = scmp.lt.s32.totalorder %s18, 7
      %p199 = pnand %p197, %p198
      %p200 = pneg %p199
      // Predicated region
      $region29: #{tpu_custom_call.1} parent=5 // pred_check
        _
      $region30: #{tpu_custom_call.1} parent=5 // pred_check_branch
        %202 = sbr.rel (%p199) target = $region32
      $region31: #{tpu_custom_call.1} parent=5 // pred_region
        %s203 = ssub.s32 %s18, 1
        %s204 = sand.u32 %s45, 1
        %s205 = scalar_lea.sflag [#allocation4], %s204
        %s206 = sand.u32 %s45, 1
        %s207 = smul.addr %s206, 8
        %s208 = scalar_lea.vmem [#allocation3], %s207
        // Predicated region
        $region33: #{tpu_custom_call.1} parent=31 // pred_check
          %p209 = pneg %p58
        $region34: #{tpu_custom_call.1} parent=31 // pred_check_branch
          %211 = sbr.rel (%p209) target = $region36
        $region35: #{tpu_custom_call.1} parent=31 // pred_region
          %212 = dma.done %s205, 128
        $region36: #{tpu_custom_call.1} parent=31 // pred_fallthru
          _
        %s213 = sand.u32 %s71, 1
        %s214 = scalar_lea.sflag [#allocation7], %s213
        %s215 = sand.u32 %s71, 1
        %s216 = smul.addr %s215, 64
        %s217 = scalar_lea.vmem [#allocation6], %s216
        // Predicated region
        $region37: #{tpu_custom_call.1} parent=31 // pred_check
          %p218 = pneg %p84
        $region38: #{tpu_custom_call.1} parent=31 // pred_check_branch
          %220 = sbr.rel (%p218) target = $region40
        $region39: #{tpu_custom_call.1} parent=31 // pred_region
          %221 = dma.done %s214, 1024
        $region40: #{tpu_custom_call.1} parent=31 // pred_fallthru
          _
        %s222 = sand.u32 %s45, 1
        %s223 = scalar_lea.sflag [#allocation4], %s222
        %s224 = sand.u32 %s45, 1
        %s225 = smul.addr %s224, 8
        %s226 = scalar_lea.vmem [#allocation3], %s225
        %p227 = pneg %p58
        %p228 = pneg %p55
        %s229 = sand.u32 %s71, 1
        %s230 = scalar_lea.sflag [#allocation7], %s229
        %s231 = sand.u32 %s71, 1
        %s232 = smul.addr %s231, 64
        %s233 = scalar_lea.vmem [#allocation6], %s232
        %p234 = pneg %p84
        %p235 = pneg %p81
        %p236 = pneg %p105
        %p237 = pneg %p102
        %p238 = pneg %p131
        %p239 = pneg %p128
        %s240 = sand.u32 %s118, 1
        %s241 = scalar_lea.sflag [#allocation5], %s240
        %s242 = sand.u32 %s118, 1
        %s243 = smul.addr %s242, 16
        %s244 = scalar_lea.vmem [#allocation8], %s243
        %s245 = smul.u32 2, %s27
        %s246 = smul.u32 16, %s28
        %s247 = smul.u32 2, %s27
        %p249 = scmp.eq.s32.totalorder %s28, 0
        // Predicated region
        $region41: #{tpu_custom_call.1} parent=31 // pred_check
          %p250 = pneg %p249
        $region42: #{tpu_custom_call.1} parent=31 // pred_check_branch
          %252 = sbr.rel (%p250) target = $region44
        $region43: #{tpu_custom_call.1} parent=31 // pred_region
          %253 = vst [vmem:[#allocation2] sm:$0xff] 0.0
          %254 = vst [vmem:[#allocation2 + $0x8] sm:$0xff] 0.0
        $region44: #{tpu_custom_call.1} parent=31 // pred_fallthru
          _
        %v255 = vld [vmem:[#allocation2] sm:$0xff]
        %v256 = vld [vmem:[#allocation2 + $0x8] sm:$0xff]
        %v257 = vld [vmem:[%s208] sm:$0xf]
        %v258 = vld [vmem:[%s208 + $0x4] sm:$0xf]
        %v259 = vld [vmem:[%s217] sm:$0xf]
        %v260 = vld [vmem:[%s217 + $0x4] sm:$0xf]
        %v261 = vld [vmem:[%s217 + $0x8] sm:$0xf]
        %v262 = vld [vmem:[%s217 + $0xc] sm:$0xf]
        %v263 = vld [vmem:[%s217 + $0x10] sm:$0xf]
        %v264 = vld [vmem:[%s217 + $0x14] sm:$0xf]
        %v265 = vld [vmem:[%s217 + $0x18] sm:$0xf]
        %v266 = vld [vmem:[%s217 + $0x1c] sm:$0xf]
        %v267 = vld [vmem:[%s217 + $0x20] sm:$0xf]
        %v268 = vld [vmem:[%s217 + $0x24] sm:$0xf]
        %v269 = vld [vmem:[%s217 + $0x28] sm:$0xf]
        %v270 = vld [vmem:[%s217 + $0x2c] sm:$0xf]
        %v271 = vld [vmem:[%s217 + $0x30] sm:$0xf]
        %v272 = vld [vmem:[%s217 + $0x34] sm:$0xf]
        %v273 = vld [vmem:[%s217 + $0x38] sm:$0xf]
        %v274 = vld [vmem:[%s217 + $0x3c] sm:$0xf]
        %v277 = vunpack.c.l.b16 %v257
        %v278 = vunpack.c.l.b16 %v258
        %v279 = vpack.c.b16 %v278, %v277
        %v297 = vunpack.c.l.b16 %v259
        %v298 = vunpack.c.l.b16 %v260
        %v299 = vunpack.c.l.b16 %v261
        %v300 = vunpack.c.l.b16 %v262
        %v301 = vunpack.c.l.b16 %v263
        %v302 = vunpack.c.l.b16 %v264
        %v303 = vunpack.c.l.b16 %v265
        %v304 = vunpack.c.l.b16 %v266
        %v305 = vunpack.c.l.b16 %v267
        %v306 = vunpack.c.l.b16 %v268
        %v307 = vunpack.c.l.b16 %v269
        %v308 = vunpack.c.l.b16 %v270
        %v309 = vunpack.c.l.b16 %v271
        %v310 = vunpack.c.l.b16 %v272
        %v311 = vunpack.c.l.b16 %v273
        %v312 = vunpack.c.l.b16 %v274
        %v313 = vpack.c.b16 %v298, %v297
        %v314 = vpack.c.b16 %v300, %v299
        %v315 = vpack.c.b16 %v302, %v301
        %v316 = vpack.c.b16 %v304, %v303
        %v317 = vpack.c.b16 %v306, %v305
        %v318 = vpack.c.b16 %v308, %v307
        %v319 = vpack.c.b16 %v310, %v309
        %v320 = vpack.c.b16 %v312, %v311
        %329 = vmatprep.subr.bf16.mxu0 0
        %330 = vmatpush1.bf16.msra.mxu0 %v313
        %331 = vmatprep.subr.bf16.mxu0 0
        %332 = vmatpush1.bf16.msra.mxu0 %v314
        %333 = vmatprep.subr.bf16.mxu0 0
        %334 = vmatpush1.bf16.msra.mxu0 %v315
        %335 = vmatprep.subr.bf16.mxu0 0
        %336 = vmatpush1.bf16.msra.mxu0 %v316
        %337 = vmatprep.subr.bf16.mxu0 0
        %338 = vmatpush1.bf16.msra.mxu0 %v317
        %339 = vmatprep.subr.bf16.mxu0 0
        %340 = vmatpush1.bf16.msra.mxu0 %v318
        %341 = vmatprep.subr.bf16.mxu0 0
        %342 = vmatpush1.bf16.msra.mxu0 %v319
        %343 = vmatprep.subr.bf16.mxu0 0
        %344 = vmatpush1.bf16.msra.mxu0 %v320
        %345 = vmatprep.subr.bf16.mxu0 0
        %346 = vmatpush1.bf16.msra.mxu0 0
        %347 = vmatprep.subr.bf16.mxu0 0
        %348 = vmatpush1.bf16.msra.mxu0 0
        %349 = vmatprep.subr.bf16.mxu0 0
        %350 = vmatpush1.bf16.msra.mxu0 0
        %351 = vmatprep.subr.bf16.mxu0 0
        %352 = vmatpush1.bf16.msra.mxu0 0
        %353 = vmatprep.subr.bf16.mxu0 0
        %354 = vmatpush1.bf16.msra.mxu0 0
        %355 = vmatprep.subr.bf16.mxu0 0
        %356 = vmatpush1.bf16.msra.mxu0 0
        %357 = vmatprep.subr.bf16.mxu0 0
        %358 = vmatpush1.bf16.msra.mxu0 0
        %359 = vmatprep.subr.bf16.mxu0 0
        %360 = vmatpush1.bf16.msra.mxu0 0
        %361 = vmatprep.mubr.bf16.mxu0 0
        %362 = vmatmul.mubr.bf16.gmra.mrb[0].mxu0 %v279
        %v363 = vpop.f32.mrb[0].mxu0
        %v364 = vadd.f32 0.0, %v363
        %v365 = vpop.f32.mrb[0].mxu0
        %v366 = vpop.f32.mrb[0].mxu0
        %v367 = vadd.f32 0.0, %v366
        %v368 = vpop.f32.mrb[0].mxu0
        %369 = vdwg.mxu0
        %v370 = vadd.f32 %v255, %v364
        %v371 = vadd.f32 %v256, %v367
        %372 = vst [vmem:[#allocation2] sm:$0xff] %v370
        %373 = vst [vmem:[#allocation2 + $0x8] sm:$0xff] %v371
        %p374 = scmp.eq.s32.totalorder %s28, 2
        // Predicated region
        $region45: #{tpu_custom_call.1} parent=31 // pred_check
          %p375 = pneg %p374
        $region46: #{tpu_custom_call.1} parent=31 // pred_check_branch
          %377 = sbr.rel (%p375) target = $region48
        $region47: #{tpu_custom_call.1} parent=31 // pred_region
          %v378 = vld [vmem:[#allocation2] sm:$0xff]
          %v379 = vld [vmem:[#allocation2 + $0x8] sm:$0xff]
          %v380 = vld [vmem:[%s2] sm:$0x1]
          %v382 = vlaneseq
          %v383 = vshrl.u32 %v382, 7
          %v384 = vsub.s32 0, %v383
          %v385 = vrot.slane %v380, %v384
          %v387 = vadd.f32 %v378, %v385
          %v388 = vadd.f32 %v379, %v385
          %v389 = vmul.f32 %v387, %v387
          %v390 = vmul.f32 %v388, %v388
          %v391 = vrot.slane %v389, 4
          %v392 = vadd.f32 %v389, %v391
          %v393 = vrot.slane %v392, 2
          %v394 = vadd.f32 %v392, %v393
          %v395 = vrot.slane %v394, 1
          %v396 = vadd.f32 %v394, %v395
          %v397 = vrot.slane %v390, 4
          %v398 = vadd.f32 %v390, %v397
          %v399 = vrot.slane %v398, 2
          %v400 = vadd.f32 %v398, %v399
          %v401 = vrot.slane %v400, 1
          %v402 = vadd.f32 %v400, %v401
          %v403 = vadd.f32 %v396, 1e-09
          %v404 = vadd.f32 %v402, 1e-09
          %v405 = vrsqrt.pop %v403
          %v406 = vmul.f32 %v403, %v405
          %vm407 = vcmp.eq.f32.partialorder %v403, inf
          %v408 = vsel %vm407, %v403, %v406
          %vm409 = vcmp.eq.f32.partialorder %v403, 0.0
          %v410 = vand.u32 %v403, 2147483648
          %v411 = vsel %vm409, %v410, %v408
          %v412 = vrsqrt.pop %v404
          %v413 = vmul.f32 %v404, %v412
          %vm414 = vcmp.eq.f32.partialorder %v404, inf
          %v415 = vsel %vm414, %v404, %v413
          %vm416 = vcmp.eq.f32.partialorder %v404, 0.0
          %v417 = vand.u32 %v404, 2147483648
          %v418 = vsel %vm416, %v417, %v415
          %v419 = vadd.f32 %v396, 1.0
          %v420 = vadd.f32 %v402, 1.0
          %v421 = vrcp.pop %v419
          %v422 = vrcp.pop %v420
          %v423 = vmul.f32 %v411, %v421
          %v424 = vmul.f32 %v418, %v422
          %v425 = vmul.f32 %v387, %v423
          %v426 = vmul.f32 %v388, %v424
          %427 = vst [vmem:[%s244] sm:$0xff] %v425
          %428 = vst [vmem:[%s244 + $0x8] sm:$0xff] %v426
        $region48: #{tpu_custom_call.1} parent=31 // pred_fallthru
          _
        %s429 = sand.u32 %s118, 1
        %s430 = scalar_lea.sflag [#allocation5], %s429
        %s431 = sand.u32 %s118, 1
        %s432 = smul.addr %s431, 16
        %s433 = scalar_lea.vmem [#allocation8], %s432
        // Predicated region
        $region49: #{tpu_custom_call.1} parent=31 // pred_check
          %p434 = pneg %p128
        $region50: #{tpu_custom_call.1} parent=31 // pred_check_branch
          %436 = sbr.rel (%p434) target = $region52
        $region51: #{tpu_custom_call.1} parent=31 // pred_region
          %s437 = smul.u32 2, %s27
          %s439 = ssub.s32 256, 256
          %440 = vsyncadd %s430, %s439
          %s441 = smul.addr %s437, 128
          %s442 = scalar_lea.hbm %s3, %s441
          %s443 = sshll.u32 %s433, 4
          %s444 = int_to_ptr.vmem [resolvable:$true] %s443
          %449 = dma.vmem_to_hbm [thread:$0]  %s444, 256, %s442, %s430, 128, 128, 8
        $region52: #{tpu_custom_call.1} parent=31 // pred_fallthru
          _
      $region32: #{tpu_custom_call.1} parent=5 // pred_fallthru
        _
      %p450 = scmp.le.s32.totalorder 2, %s18
      // Predicated region
      $region53: #{tpu_custom_call.1} parent=5 // pred_check
        %p451 = pneg %p450
      $region54: #{tpu_custom_call.1} parent=5 // pred_check_branch
        %453 = sbr.rel (%p451) target = $region56
      $region55: #{tpu_custom_call.1} parent=5 // pred_region
        %s454 = ssub.s32 %s18, 2
        // Predicated region
        $region57: #{tpu_custom_call.1} parent=55 // pred_check
          %p455 = pneg %p134
        $region58: #{tpu_custom_call.1} parent=55 // pred_check_branch
          %457 = sbr.rel (%p455) target = $region60
        $region59: #{tpu_custom_call.1} parent=55 // pred_region
          %s458 = sand.u32 %s119, 1
          %s459 = scalar_lea.sflag [#allocation5], %s458
          %s460 = sand.u32 %s119, 1
          %s461 = smul.addr %s460, 16
          %s462 = scalar_lea.vmem [#allocation8], %s461
          %463 = dma.done %s459, 256
        $region60: #{tpu_custom_call.1} parent=55 // pred_fallthru
          _
      $region56: #{tpu_custom_call.1} parent=5 // pred_fallthru
        _
    $region6: #{tpu_custom_call.1} parent=1 // loop_footer
      %s22 = sadd.s32 1, %s18
    $region7: #{tpu_custom_call.1} parent=1 // loop_footer_branch
      %17 = sbr.rel target = $region3
    $region8: #{tpu_custom_call.1} parent=1 // loop_exit
      _
    %464 = vsyncpa [#allocation4], 1
    %s465 = scalar_lea.sflag [#allocation4], 1
    %466 = vsyncpa %s465, 1
    %467 = vsyncpa [#allocation7], 1
    %s468 = scalar_lea.sflag [#allocation7], 1
    %469 = vsyncpa %s468, 1
    %470 = vsyncpa [#allocation5], 1
    %s471 = scalar_lea.sflag [#allocation5], 1
    %472 = vsyncpa %s471, 1

</llo_original>
